<compile_context>
chip_gen: v7x
topology: tpu7x:2x2x1
jax: 0.10.0
libtpu: 0.0.40
codegen_flags: <defaults>
</compile_context>

<pallas_src>
import functools

import jax
import jax.numpy as jnp
from jax.experimental import pallas as pl
from jax.experimental.pallas import tpu as pltpu


def _round_up(x: int, m: int) -> int:
    return ((x + m - 1) // m) * m


def _melaug_strip_kernel(x_hbm, bounds_ref, o_hbm, fbuf, tbuf, sem,
                         *, f_align, t_align):
    """Zero the freq/time mask strips of one batch chunk, in place.

    x_hbm / o_hbm : raw HBM refs of the full (B, F, T) spectrogram (aliased).
    bounds_ref    : SMEM int32[6] = (f_start, f_end, f_win, t_start, t_end, t_win)
    fbuf          : VMEM (Bc, FW, T) scratch -- frequency-window strip
    tbuf          : VMEM (Bc, F, TW) scratch -- time-window strip
    sem           : 2 DMA semaphores
    """
    f_start = bounds_ref[0]
    f_end = bounds_ref[1]
    f_win = bounds_ref[2]
    t_start = bounds_ref[3]
    t_end = bounds_ref[4]
    t_win = bounds_ref[5]

    # Window starts are tile-aligned by the wrapper; tell Mosaic so the strip
    # DMAs stay dense (no mid-tile starts / masked partial stores).
    if f_align > 1:
        f_win = pl.multiple_of(f_win, f_align)
    if t_align > 1:
        t_win = pl.multiple_of(t_win, t_align)

    bc, FW, T = fbuf.shape
    _, F, TW = tbuf.shape
    b0 = pl.program_id(0) * bc

    do_f = f_end > f_start
    do_t = t_end > t_start

    f_read = pltpu.make_async_copy(
        x_hbm.at[pl.ds(b0, bc), pl.ds(f_win, FW), :], fbuf, sem.at[0])
    t_read = pltpu.make_async_copy(
        x_hbm.at[pl.ds(b0, bc), :, pl.ds(t_win, TW)], tbuf, sem.at[1])
    f_write = pltpu.make_async_copy(
        fbuf, o_hbm.at[pl.ds(b0, bc), pl.ds(f_win, FW), :], sem.at[0])
    t_write = pltpu.make_async_copy(
        tbuf, o_hbm.at[pl.ds(b0, bc), :, pl.ds(t_win, TW)], sem.at[1])

    # Kick off both strip reads so they overlap.  An empty mask skips its strip
    # entirely (zero HBM traffic for that axis on ~7% of calls).
    @pl.when(do_f)
    def _():
        f_read.start()

    @pl.when(do_t)
    def _():
        t_read.start()

    # Narrow index vectors (no full-size iotas); window offsets are added so
    # indices are global, not strip-local.
    f_rows = jax.lax.broadcasted_iota(jnp.int32, (1, FW, 1), 1) + f_win
    t_cols_all = jax.lax.broadcasted_iota(jnp.int32, (1, 1, T), 2)
    f_rows_all = jax.lax.broadcasted_iota(jnp.int32, (1, F, 1), 1)
    t_cols = jax.lax.broadcasted_iota(jnp.int32, (1, 1, TW), 2) + t_win

    def combined_mask(rows, cols):
        freq_masked = (rows >= f_start) & (rows < f_end)
        time_masked = (cols >= t_start) & (cols < t_end)
        return freq_masked | time_masked

    # Frequency strip: rows [f_win, f_win + FW) x all T frames.
    @pl.when(do_f)
    def _():
        f_read.wait()
        v = fbuf[...]
        fbuf[...] = jnp.where(combined_mask(f_rows, t_cols_all),
                              jnp.zeros_like(v), v)

    # Strict ordering: the time-strip read must land before the freq-strip
    # writeback starts touching the overlapping (freq-win x time-win) rect.
    @pl.when(do_t)
    def _():
        t_read.wait()

    # Issue the (larger) freq-strip writeback now so it overlaps with the
    # time-strip compute below.
    @pl.when(do_f)
    def _():
        f_write.start()

    # Time strip: all F rows x frames [t_win, t_win + TW).
    @pl.when(do_t)
    def _():
        v = tbuf[...]
        tbuf[...] = jnp.where(combined_mask(f_rows_all, t_cols),
                              jnp.zeros_like(v), v)

    # No write-write race on the overlap rectangle: the freq writeback fully
    # completes before the time writeback starts.
    @pl.when(do_f)
    def _():
        f_write.wait()

    @pl.when(do_t)
    def _():
        t_write.start()
        t_write.wait()


def _sample_mask_bounds(key, dim_size, mask_param):
    """Replicates torchaudio.functional.mask_along_axis sampling (iid_masks=False).

    value      = rand() * mask_param
    min_value  = rand() * (dim_size - value)
    mask_start = floor(min_value); mask_end = floor(min_value) + floor(value)
    """
    k1, k2 = jax.random.split(key)
    value = jax.random.uniform(k1, (), jnp.float32) * mask_param
    min_value = jax.random.uniform(k2, (), jnp.float32) * (dim_size - value)
    start = min_value.astype(jnp.int32)          # floor on non-negative floats
    end = start + value.astype(jnp.int32)
    return start, end


def apply_freq_time_masks(melspec, f_start, f_end, t_start, t_end,
                          freq_mask_param=15, time_mask_param=15):
    """Apply the (shared-across-batch) freq+time masks in place via Pallas.

    NOTE: call under jax.jit with melspec donated (donate_argnums) so the
    input_output_aliases={0:0} update is truly in place (no defensive copy).
    """
    B, F, T = melspec.shape
    itemsize = jnp.dtype(melspec.dtype).itemsize
    sub = 8 * max(1, 4 // itemsize)          # sublane pack: 8 f32 / 16 bf16 / 32 i8

    # Static strip widths: wide enough that a sublane/lane-ALIGNED window still
    # contains any sampled mask (width <= mask_param): 24 rows / 256 lanes.
    FW = min(F, _round_up(freq_mask_param + sub - 1, sub))
    TW = min(T, _round_up(time_mask_param + 128 - 1, 128))

    # Tile-aligned window starts (align down, then clamp inside the array).
    f_win = jnp.clip((f_start // sub) * sub, 0, F - FW).astype(jnp.int32)
    t_win = jnp.clip((t_start // 128) * 128, 0, T - TW).astype(jnp.int32)
    bounds = jnp.stack(
        [f_start, f_end, f_win, t_start, t_end, t_win]).astype(jnp.int32)

    # Alignment hints are only sound when clamping cannot yield an unaligned
    # start (full-axis window, or axis length itself a multiple of the align).
    f_align = sub if (FW == F or F % sub == 0) else 1
    t_align = 128 if (TW == T or T % 128 == 0) else 1

    # Batch chunking: bound VMEM scratch independently of B (v7x has 64 MiB of
    # physical VMEM) and let v7x's two TensorCores split the chunks via the
    # parallel grid axis.  Bc = largest divisor of B whose strips fit ~6 MiB.
    per_batch_bytes = itemsize * (FW * T + F * TW)
    budget = 6 * 1024 * 1024
    max_bc = max(1, budget // per_batch_bytes)
    bc = 1
    for d in range(1, B + 1):
        if B % d == 0 and d <= max_bc:
            bc = d
    grid = (B // bc,)

    # VMEM limit derived from the actual strip sizes (+ headroom for masking
    # temporaries), not hard-coded.
    vmem_limit = int(min(2 * bc * per_batch_bytes + (4 << 20), 64 << 20))

    kernel = functools.partial(_melaug_strip_kernel,
                               f_align=f_align, t_align=t_align)

    return pl.pallas_call(
        kernel,
        out_shape=jax.ShapeDtypeStruct(melspec.shape, melspec.dtype),
        grid=grid,
        in_specs=[
            # melspec is input 0 on purpose: it is aliased with output 0.
            pl.BlockSpec(memory_space=pl.ANY),                  # raw HBM ref
            pl.BlockSpec(memory_space=pltpu.MemorySpace.SMEM),  # mask scalars
        ],
        out_specs=pl.BlockSpec(memory_space=pl.ANY),
        scratch_shapes=[
            pltpu.VMEM((bc, FW, T), melspec.dtype),   # freq strip
            pltpu.VMEM((bc, F, TW), melspec.dtype),   # time strip
            pltpu.SemaphoreType.DMA((2,)),
        ],
        input_output_aliases={0: 0},  # output buffer IS the input buffer
        compiler_params=pltpu.CompilerParams(
            dimension_semantics=("parallel",),
            vmem_limit_bytes=vmem_limit),
    )(melspec, bounds)


def mel_aug(melspec, key, freq_mask_param=15, time_mask_param=15):
    """FrequencyMasking(15) -> TimeMasking(15), iid_masks=False, fill=0.0.

    Run under jax.jit with melspec donated (donate_argnums=0) so the Pallas
    output aliasing is a true in-place update.
    """
    _, F, T = melspec.shape
    k_f, k_t = jax.random.split(key)
    f_start, f_end = _sample_mask_bounds(k_f, F, freq_mask_param)
    t_start, t_end = _sample_mask_bounds(k_t, T, time_mask_param)
    return apply_freq_time_masks(melspec, f_start, f_end, t_start, t_end,
                                 freq_mask_param, time_mask_param)


if __name__ == "__main__":
    key = jax.random.PRNGKey(0)
    k_data, k_aug = jax.random.split(key)

    # Small mel spectrogram: batch=4, 32 mel bins, 512 time frames.
    B, F, T = 4, 32, 512
    melspec = jax.random.normal(k_data, (B, F, T), dtype=jnp.float32)

    # Pure-JAX reference with the exact same sampled bounds (mel_aug splits its
    # key the same way).  Computed & materialized BEFORE the donating kernel
    # call consumes melspec's buffer.
    k_f, k_t = jax.random.split(k_aug)
    f_start, f_end = _sample_mask_bounds(k_f, F, 15)
    t_start, t_end = _sample_mask_bounds(k_t, T, 15)
    f_idx = jnp.arange(F)[None, :, None]
    t_idx = jnp.arange(T)[None, None, :]
    ref_mask = ((f_idx >= f_start) & (f_idx < f_end)) | \
               ((t_idx >= t_start) & (t_idx < t_end))
    expected = jax.block_until_ready(
        jnp.where(ref_mask, jnp.zeros_like(melspec), melspec))

    # Donate melspec so input_output_aliases={0:0} is a true in-place update
    # (no defensive full-array copy re-introducing full HBM traffic).
    mel_aug_jit = jax.jit(mel_aug, donate_argnums=0, static_argnums=(2, 3))
    out = jax.block_until_ready(mel_aug_jit(melspec, k_aug))

    assert out.shape == (B, F, T)
    assert out.dtype == jnp.float32
    assert bool(jnp.array_equal(out, expected)), "kernel output mismatch"
    print("KERNEL_OK")
</pallas_src>

<mosaic_0001>
module attributes {stable_mosaic.version = 11 : i64} {
  func.func @_melaug_strip_kernel(%arg0: i32, %arg1: memref<4x32x512xf32, #tpu.memory_space<any>>, %arg2: memref<6xi32, #tpu.memory_space<smem>>, %arg3: memref<4x32x512xf32, #tpu.memory_space<any>>, %arg4: memref<4x24x512xf32, #tpu.memory_space<vmem>>, %arg5: memref<4x32x256xf32, #tpu.memory_space<vmem>>, %arg6: memref<2x!tpu.dma_semaphore, #tpu.memory_space<semaphore_mem>>) attributes {dimension_semantics = [#tpu.dimension_semantics<parallel>], iteration_bounds = array<i64: 1>, scalar_prefetch = 0 : i64, scratch_operands = 3 : i64, tpu.core_type = #tpu.core_type<tc>, window_params = [{}, {transform_indices = @transform_1, window_bounds = array<i64: 6>}, {}]} {
    %c0 = arith.constant 0 : index
    %0 = memref.load %arg2[%c0] : memref<6xi32, #tpu.memory_space<smem>>
    %c1 = arith.constant 1 : index
    %1 = memref.load %arg2[%c1] : memref<6xi32, #tpu.memory_space<smem>>
    %c2 = arith.constant 2 : index
    %2 = memref.load %arg2[%c2] : memref<6xi32, #tpu.memory_space<smem>>
    %c3 = arith.constant 3 : index
    %3 = memref.load %arg2[%c3] : memref<6xi32, #tpu.memory_space<smem>>
    %c4 = arith.constant 4 : index
    %4 = memref.load %arg2[%c4] : memref<6xi32, #tpu.memory_space<smem>>
    %c5 = arith.constant 5 : index
    %5 = memref.load %arg2[%c5] : memref<6xi32, #tpu.memory_space<smem>>
    %6 = tpu.assume_multiple %2, 8 : i32
    %7 = tpu.assume_multiple %5, 128 : i32
    %c4_i32 = arith.constant 4 : i32
    %8 = arith.muli %arg0, %c4_i32 : i32
    %9 = arith.cmpi sgt, %1, %0 : i32
    %10 = arith.cmpi sgt, %4, %3 : i32
    %11 = arith.extui %9 : i1 to i32
    %c0_i32 = arith.constant 0 : i32
    %c0_i32_0 = arith.constant 0 : i32
    %12 = arith.cmpi ne, %11, %c0_i32_0 : i32
    scf.if %12 {
      %c0_i32_13 = arith.constant 0 : i32
      %35 = tpu.memref_slice %arg1[%8, %6, %c0_i32_13] : memref<4x32x512xf32, #tpu.memory_space<any>> -> memref<4x24x512xf32, #tpu.memory_space<any>>
      %36 = tpu.memref_slice %arg6[%c0_i32] : memref<2x!tpu.dma_semaphore, #tpu.memory_space<semaphore_mem>> -> memref<1x!tpu.dma_semaphore, #tpu.memory_space<semaphore_mem>>
      %37 = tpu.memref_squeeze %36 : memref<1x!tpu.dma_semaphore, #tpu.memory_space<semaphore_mem>> -> memref<!tpu.dma_semaphore, #tpu.memory_space<semaphore_mem>>
      tpu.enqueue_dma source(%35 : memref<4x24x512xf32, #tpu.memory_space<any>>) target(%arg4 : memref<4x24x512xf32, #tpu.memory_space<vmem>>) target_semaphore(%37 : memref<!tpu.dma_semaphore, #tpu.memory_space<semaphore_mem>>)
    } else {
    }
    %13 = arith.extui %10 : i1 to i32
    %c1_i32 = arith.constant 1 : i32
    %c0_i32_1 = arith.constant 0 : i32
    %14 = arith.cmpi ne, %13, %c0_i32_1 : i32
    scf.if %14 {
      %c0_i32_13 = arith.constant 0 : i32
      %35 = tpu.memref_slice %arg1[%8, %c0_i32_13, %7] : memref<4x32x512xf32, #tpu.memory_space<any>> -> memref<4x32x256xf32, #tpu.memory_space<any>>
      %36 = tpu.memref_slice %arg6[%c1_i32] : memref<2x!tpu.dma_semaphore, #tpu.memory_space<semaphore_mem>> -> memref<1x!tpu.dma_semaphore, #tpu.memory_space<semaphore_mem>>
      %37 = tpu.memref_squeeze %36 : memref<1x!tpu.dma_semaphore, #tpu.memory_space<semaphore_mem>> -> memref<!tpu.dma_semaphore, #tpu.memory_space<semaphore_mem>>
      tpu.enqueue_dma source(%35 : memref<4x32x256xf32, #tpu.memory_space<any>>) target(%arg5 : memref<4x32x256xf32, #tpu.memory_space<vmem>>) target_semaphore(%37 : memref<!tpu.dma_semaphore, #tpu.memory_space<semaphore_mem>>)
    } else {
    }
    %15 = tpu.iota {dimensions = array<i32: 1>} : vector<1x24x1xi32>
    %16 = vector.broadcast %6 : i32 to vector<1x24x1xi32>
    %17 = arith.addi %15, %16 : vector<1x24x1xi32>
    %18 = tpu.iota {dimensions = array<i32: 2>} : vector<1x1x512xi32>
    %19 = tpu.iota {dimensions = array<i32: 1>} : vector<1x32x1xi32>
    %20 = tpu.iota {dimensions = array<i32: 2>} : vector<1x1x256xi32>
    %21 = vector.broadcast %7 : i32 to vector<1x1x256xi32>
    %22 = arith.addi %20, %21 : vector<1x1x256xi32>
    %23 = arith.extui %9 : i1 to i32
    %c0_i32_2 = arith.constant 0 : i32
    %c0_i32_3 = arith.constant 0 : i32
    %24 = arith.cmpi ne, %23, %c0_i32_3 : i32
    scf.if %24 {
      %c0_i32_13 = arith.constant 0 : i32
      %35 = tpu.memref_slice %arg1[%8, %6, %c0_i32_13] : memref<4x32x512xf32, #tpu.memory_space<any>> -> memref<4x24x512xf32, #tpu.memory_space<any>>
      %36 = tpu.memref_slice %arg6[%c0_i32_2] : memref<2x!tpu.dma_semaphore, #tpu.memory_space<semaphore_mem>> -> memref<1x!tpu.dma_semaphore, #tpu.memory_space<semaphore_mem>>
      %37 = tpu.memref_squeeze %36 : memref<1x!tpu.dma_semaphore, #tpu.memory_space<semaphore_mem>> -> memref<!tpu.dma_semaphore, #tpu.memory_space<semaphore_mem>>
      tpu.wait_dma2 semaphore(%37 : memref<!tpu.dma_semaphore, #tpu.memory_space<semaphore_mem>>) src(%35 : memref<4x24x512xf32, #tpu.memory_space<any>>) dst(%arg4 : memref<4x24x512xf32, #tpu.memory_space<vmem>>)
      %c0_14 = arith.constant 0 : index
      %c0_15 = arith.constant 0 : index
      %c0_16 = arith.constant 0 : index
      %38 = vector.load %arg4[%c0_14, %c0_15, %c0_16] : memref<4x24x512xf32, #tpu.memory_space<vmem>>, vector<4x24x512xf32>
      %39 = vector.broadcast %0 : i32 to vector<1x24x1xi32>
      %40 = arith.cmpi sge, %17, %39 : vector<1x24x1xi32>
      %41 = vector.broadcast %1 : i32 to vector<1x24x1xi32>
      %42 = arith.cmpi slt, %17, %41 : vector<1x24x1xi32>
      %43 = arith.andi %40, %42 : vector<1x24x1xi1>
      %44 = vector.broadcast %3 : i32 to vector<1x1x512xi32>
      %45 = arith.cmpi sge, %18, %44 : vector<1x1x512xi32>
      %46 = vector.broadcast %4 : i32 to vector<1x1x512xi32>
      %47 = arith.cmpi slt, %18, %46 : vector<1x1x512xi32>
      %48 = arith.andi %45, %47 : vector<1x1x512xi1>
      %49 = vector.broadcast %43 : vector<1x24x1xi1> to vector<1x24x512xi1>
      %50 = vector.broadcast %48 : vector<1x1x512xi1> to vector<1x24x512xi1>
      %51 = arith.ori %49, %50 : vector<1x24x512xi1>
      %cst = arith.constant 0.000000e+00 : f32
      %52 = vector.broadcast %cst : f32 to vector<4x24x512xf32>
      %53 = vector.shape_cast %51 : vector<1x24x512xi1> to vector<1x24x512xi1>
      %54 = vector.broadcast %53 : vector<1x24x512xi1> to vector<4x24x512xi1>
      %55 = arith.select %54, %52, %38 : vector<4x24x512xi1>, vector<4x24x512xf32>
      %c0_17 = arith.constant 0 : index
      %c0_18 = arith.constant 0 : index
      %c0_19 = arith.constant 0 : index
      %56 = vector.load %arg4[%c0_17, %c0_18, %c0_19] : memref<4x24x512xf32, #tpu.memory_space<vmem>>, vector<4x24x512xf32>
      tpu.vector_store %arg4[%c0_17, %c0_18, %c0_19], %55 {strides = array<i32>} : memref<4x24x512xf32, #tpu.memory_space<vmem>>, vector<4x24x512xf32>,
    } else {
    }
    %25 = arith.extui %10 : i1 to i32
    %c1_i32_4 = arith.constant 1 : i32
    %c0_i32_5 = arith.constant 0 : i32
    %26 = arith.cmpi ne, %25, %c0_i32_5 : i32
    scf.if %26 {
      %c0_i32_13 = arith.constant 0 : i32
      %35 = tpu.memref_slice %arg1[%8, %c0_i32_13, %7] : memref<4x32x512xf32, #tpu.memory_space<any>> -> memref<4x32x256xf32, #tpu.memory_space<any>>
      %36 = tpu.memref_slice %arg6[%c1_i32_4] : memref<2x!tpu.dma_semaphore, #tpu.memory_space<semaphore_mem>> -> memref<1x!tpu.dma_semaphore, #tpu.memory_space<semaphore_mem>>
      %37 = tpu.memref_squeeze %36 : memref<1x!tpu.dma_semaphore, #tpu.memory_space<semaphore_mem>> -> memref<!tpu.dma_semaphore, #tpu.memory_space<semaphore_mem>>
      tpu.wait_dma2 semaphore(%37 : memref<!tpu.dma_semaphore, #tpu.memory_space<semaphore_mem>>) src(%35 : memref<4x32x256xf32, #tpu.memory_space<any>>) dst(%arg5 : memref<4x32x256xf32, #tpu.memory_space<vmem>>)
    } else {
    }
    %27 = arith.extui %9 : i1 to i32
    %c0_i32_6 = arith.constant 0 : i32
    %c0_i32_7 = arith.constant 0 : i32
    %28 = arith.cmpi ne, %27, %c0_i32_7 : i32
    scf.if %28 {
      %c0_i32_13 = arith.constant 0 : i32
      %35 = tpu.memref_slice %arg3[%8, %6, %c0_i32_13] : memref<4x32x512xf32, #tpu.memory_space<any>> -> memref<4x24x512xf32, #tpu.memory_space<any>>
      %36 = tpu.memref_slice %arg6[%c0_i32_6] : memref<2x!tpu.dma_semaphore, #tpu.memory_space<semaphore_mem>> -> memref<1x!tpu.dma_semaphore, #tpu.memory_space<semaphore_mem>>
      %37 = tpu.memref_squeeze %36 : memref<1x!tpu.dma_semaphore, #tpu.memory_space<semaphore_mem>> -> memref<!tpu.dma_semaphore, #tpu.memory_space<semaphore_mem>>
      tpu.enqueue_dma source(%arg4 : memref<4x24x512xf32, #tpu.memory_space<vmem>>) target(%35 : memref<4x24x512xf32, #tpu.memory_space<any>>) target_semaphore(%37 : memref<!tpu.dma_semaphore, #tpu.memory_space<semaphore_mem>>)
    } else {
    }
    %29 = arith.extui %10 : i1 to i32
    %c0_i32_8 = arith.constant 0 : i32
    %30 = arith.cmpi ne, %29, %c0_i32_8 : i32
    scf.if %30 {
      %c0_13 = arith.constant 0 : index
      %c0_14 = arith.constant 0 : index
      %c0_15 = arith.constant 0 : index
      %35 = vector.load %arg5[%c0_13, %c0_14, %c0_15] : memref<4x32x256xf32, #tpu.memory_space<vmem>>, vector<4x32x256xf32>
      %36 = vector.broadcast %0 : i32 to vector<1x32x1xi32>
      %37 = arith.cmpi sge, %19, %36 : vector<1x32x1xi32>
      %38 = vector.broadcast %1 : i32 to vector<1x32x1xi32>
      %39 = arith.cmpi slt, %19, %38 : vector<1x32x1xi32>
      %40 = arith.andi %37, %39 : vector<1x32x1xi1>
      %41 = vector.broadcast %3 : i32 to vector<1x1x256xi32>
      %42 = arith.cmpi sge, %22, %41 : vector<1x1x256xi32>
      %43 = vector.broadcast %4 : i32 to vector<1x1x256xi32>
      %44 = arith.cmpi slt, %22, %43 : vector<1x1x256xi32>
      %45 = arith.andi %42, %44 : vector<1x1x256xi1>
      %46 = vector.broadcast %40 : vector<1x32x1xi1> to vector<1x32x256xi1>
      %47 = vector.broadcast %45 : vector<1x1x256xi1> to vector<1x32x256xi1>
      %48 = arith.ori %46, %47 : vector<1x32x256xi1>
      %cst = arith.constant 0.000000e+00 : f32
      %49 = vector.broadcast %cst : f32 to vector<4x32x256xf32>
      %50 = vector.shape_cast %48 : vector<1x32x256xi1> to vector<1x32x256xi1>
      %51 = vector.broadcast %50 : vector<1x32x256xi1> to vector<4x32x256xi1>
      %52 = arith.select %51, %49, %35 : vector<4x32x256xi1>, vector<4x32x256xf32>
      %c0_16 = arith.constant 0 : index
      %c0_17 = arith.constant 0 : index
      %c0_18 = arith.constant 0 : index
      %53 = vector.load %arg5[%c0_16, %c0_17, %c0_18] : memref<4x32x256xf32, #tpu.memory_space<vmem>>, vector<4x32x256xf32>
      tpu.vector_store %arg5[%c0_16, %c0_17, %c0_18], %52 {strides = array<i32>} : memref<4x32x256xf32, #tpu.memory_space<vmem>>, vector<4x32x256xf32>,
    } else {
    }
    %31 = arith.extui %9 : i1 to i32
    %c0_i32_9 = arith.constant 0 : i32
    %c0_i32_10 = arith.constant 0 : i32
    %32 = arith.cmpi ne, %31, %c0_i32_10 : i32
    scf.if %32 {
      %c0_i32_13 = arith.constant 0 : i32
      %35 = tpu.memref_slice %arg3[%8, %6, %c0_i32_13] : memref<4x32x512xf32, #tpu.memory_space<any>> -> memref<4x24x512xf32, #tpu.memory_space<any>>
      %36 = tpu.memref_slice %arg6[%c0_i32_9] : memref<2x!tpu.dma_semaphore, #tpu.memory_space<semaphore_mem>> -> memref<1x!tpu.dma_semaphore, #tpu.memory_space<semaphore_mem>>
      %37 = tpu.memref_squeeze %36 : memref<1x!tpu.dma_semaphore, #tpu.memory_space<semaphore_mem>> -> memref<!tpu.dma_semaphore, #tpu.memory_space<semaphore_mem>>
      tpu.wait_dma2 semaphore(%37 : memref<!tpu.dma_semaphore, #tpu.memory_space<semaphore_mem>>) src(%arg4 : memref<4x24x512xf32, #tpu.memory_space<vmem>>) dst(%35 : memref<4x24x512xf32, #tpu.memory_space<any>>)
    } else {
    }
    %33 = arith.extui %10 : i1 to i32
    %c1_i32_11 = arith.constant 1 : i32
    %c0_i32_12 = arith.constant 0 : i32
    %34 = arith.cmpi ne, %33, %c0_i32_12 : i32
    scf.if %34 {
      %c0_i32_13 = arith.constant 0 : i32
      %35 = tpu.memref_slice %arg3[%8, %c0_i32_13, %7] : memref<4x32x512xf32, #tpu.memory_space<any>> -> memref<4x32x256xf32, #tpu.memory_space<any>>
      %36 = tpu.memref_slice %arg6[%c1_i32_11] : memref<2x!tpu.dma_semaphore, #tpu.memory_space<semaphore_mem>> -> memref<1x!tpu.dma_semaphore, #tpu.memory_space<semaphore_mem>>
      %37 = tpu.memref_squeeze %36 : memref<1x!tpu.dma_semaphore, #tpu.memory_space<semaphore_mem>> -> memref<!tpu.dma_semaphore, #tpu.memory_space<semaphore_mem>>
      tpu.enqueue_dma source(%arg5 : memref<4x32x256xf32, #tpu.memory_space<vmem>>) target(%35 : memref<4x32x256xf32, #tpu.memory_space<any>>) target_semaphore(%37 : memref<!tpu.dma_semaphore, #tpu.memory_space<semaphore_mem>>)
      %c0_i32_14 = arith.constant 0 : i32
      %38 = tpu.memref_slice %arg3[%8, %c0_i32_14, %7] : memref<4x32x512xf32, #tpu.memory_space<any>> -> memref<4x32x256xf32, #tpu.memory_space<any>>
      %39 = tpu.memref_slice %arg6[%c1_i32_11] : memref<2x!tpu.dma_semaphore, #tpu.memory_space<semaphore_mem>> -> memref<1x!tpu.dma_semaphore, #tpu.memory_space<semaphore_mem>>
      %40 = tpu.memref_squeeze %39 : memref<1x!tpu.dma_semaphore, #tpu.memory_space<semaphore_mem>> -> memref<!tpu.dma_semaphore, #tpu.memory_space<semaphore_mem>>
      tpu.wait_dma2 semaphore(%40 : memref<!tpu.dma_semaphore, #tpu.memory_space<semaphore_mem>>) src(%arg5 : memref<4x32x256xf32, #tpu.memory_space<vmem>>) dst(%38 : memref<4x32x256xf32, #tpu.memory_space<any>>)
    } else {
    }
    return
  }
  func.func @transform_1(%arg0: i32) -> i32 {
    %c0_i32 = arith.constant 0 : i32
    %c0_i32_0 = arith.constant 0 : i32
    return %c0_i32 : i32
  }
}

</mosaic_0001>

<llo_original>
// kernel: mel_aug.1
$region0: #{mel_aug.1}
  #allocation0 [shape = 'u32[]', space=smem, size = 0x4, offset = 0x4, fixed_abs, tag = 'smem constant byte address 0x4 - core index']
  #allocation1 [shape = 'u32[144,128]{1,0:T(1,128)}', space=vmem, size = 0x12000, scoped, tag = 'internal scratch']
  #allocation2 [shape = 'f32[4,24,512]{2,1,0:T(8,128)}', space=vmem, size = 0x30000, scoped, tag = 'scratch operand']
  #allocation3 [shape = 'f32[4,32,256]{2,1,0:T(8,128)}', space=vmem, size = 0x20000, scoped, tag = 'scratch operand']
  #allocation4 [shape = 's32[2]{0}', space=sflag, size = 0x8, scoped, tag = 'scratch operand']
  #allocation7 [shape = 's32[]', space=sflag, size = 0x4, offset = 0, fixed_abs, tag = 'sflag constant byte address 0x0 - dummy sync flag']
  #allocation8 [shape = 's32[]', space=sflag, size = 0x4, offset = 0, fixed_abs, tag = 'sflag constant byte address 0x0 - dummy sync flag']
  #allocation9 [shape = 's32[]', space=sflag, size = 0x4, offset = 0, fixed_abs, tag = 'sflag constant byte address 0x0 - dummy sync flag']
  #allocation10 [shape = 's32[]', space=sflag, size = 0x4, offset = 0, fixed_abs, tag = 'sflag constant byte address 0x0 - dummy sync flag']
  %s0 = inlined_call_operand.hbm [shape: f32[4,32,512], index: 0, kind: input, shape index: {}, may-alias: {0,2}]
  %s1 = inlined_call_operand.vmem [shape: s32[6], index: 1, kind: input, shape index: {}]
  %s2 = inlined_call_operand.hbm [shape: f32[4,32,512], index: 2, kind: output, shape index: {}, may-alias: {0,2}]
  %s3 = sld [smem:[#allocation0]]
  $region42: #{mel_aug.1} parent=0
    _
  %s5 = ssub.s32 1, %s3
  %s6 = scalar_select 0, %s5, %s3
  $region1: #{mel_aug.1} parent=0
    #allocation5 [shape = 'u8[512]{0}', space=smem, size = 0x200, scoped, tag = 'input window, operand 1, single buffered']
    #allocation6 [shape = 's32[1]{0}', space=sflag, size = 0x4, scoped, tag = 'scoped memory for mel_aug.1']
    %7 = vsyncpa [#allocation6], 0
    // Predicated region
    $region2: #{mel_aug.1} parent=1 // pred_check
      _
    $region3: #{mel_aug.1} parent=1 // pred_check_branch
      %9 = sbr.rel (0) target = $region5
    $region4: #{mel_aug.1} parent=1 // pred_region
      %s11 = ssub.s32 16, 16
      %12 = vsyncadd [#allocation6], %s11
      %s14 = sshll.u32 %s1, 4
      %s15 = int_to_ptr.vmem [resolvable:$true] %s14
      %17 = dma.vmem_to_smem %s15, 16, [#allocation5], [#allocation6]
    $region5: #{mel_aug.1} parent=1 // pred_fallthru
      _
    // Predicated region
    $region6: #{mel_aug.1} parent=1 // pred_check
      _
    $region7: #{mel_aug.1} parent=1 // pred_check_branch
      %19 = sbr.rel (0) target = $region9
    $region8: #{mel_aug.1} parent=1 // pred_region
      %20 = dma.done [#allocation6], 16
    $region9: #{mel_aug.1} parent=1 // pred_fallthru
      _
    %21 = sfence
    %s22 = sld [smem:[#allocation5]]
    %s23 = sld [smem:[#allocation5 + $0x1]]
    %s24 = sld [smem:[#allocation5 + $0x2]]
    %s25 = sld [smem:[#allocation5 + $0x3]]
    %s26 = sld [smem:[#allocation5 + $0x4]]
    %s27 = sld [smem:[#allocation5 + $0x5]]
    %s28 = smul.u32 0, 4
    %p29 = scmp.gt.s32.totalorder %s23, %s22
    %p30 = scmp.gt.s32.totalorder %s26, %s25
    // Predicated region
    $region10: #{mel_aug.1} parent=1 // pred_check
      %p31 = pneg %p29
    $region11: #{mel_aug.1} parent=1 // pred_check_branch
      %33 = sbr.rel (%p31) target = $region13
    $region12: #{mel_aug.1} parent=1 // pred_region
      %s34 = sshra.s32 %s24, 3
      %s35 = sand.u32 %s24, 7
      %s36 = smul.u32 %s34, 4
      %s37 = smul.u32 %s28, 16
      %s38 = sadd.s32 %s36, %s37
      %s39 = smul.addr %s38, 128
      %s40 = scalar_lea.hbm %s0, %s39
      %s42 = sshll.u32 [#allocation2], 4
      %s43 = int_to_ptr.vmem [resolvable:$true] %s42
      %45 = dma.hbm_to_vmem [thread:$0]  %s40, 6144, %s43, [#allocation4], 2048, 1536, 96
    $region13: #{mel_aug.1} parent=1 // pred_fallthru
      _
    // Predicated region
    $region14: #{mel_aug.1} parent=1 // pred_check
      %p46 = pneg %p30
    $region15: #{mel_aug.1} parent=1 // pred_check_branch
      %48 = sbr.rel (%p46) target = $region17
    $region16: #{mel_aug.1} parent=1 // pred_region
      %s49 = sshra.s32 %s27, 7
      %s50 = sand.u32 %s27, 127
      %s51 = smul.u32 %s28, 16
      %s52 = sadd.s32 %s49, %s51
      %s53 = smul.addr %s52, 128
      %s54 = scalar_lea.hbm %s0, %s53
      %s55 = scalar_lea.sflag [#allocation4], 1
      %s57 = sshll.u32 [#allocation3], 4
      %s58 = int_to_ptr.vmem [resolvable:$true] %s57
      %60 = dma.hbm_to_vmem [thread:$0]  %s54, 4096, %s58, %s55, 512, 256, 16
    $region17: #{mel_aug.1} parent=1 // pred_fallthru
      _
    %v61 = vlaneseq
    %v62 = vshrl.u32 %v61, 7
    %v63 = vadd.s32 %v62, 8
    %v64 = vadd.s32 %v62, 16
    %v65 = vstv %s24
    %v66 = vadd.s32 %v62, %v65
    %v67 = vadd.s32 %v63, %v65
    %v68 = vadd.s32 %v64, %v65
    %v69 = vlaneseq
    %v70 = vand.u32 %v69, 127
    %v71 = vadd.s32 %v70, 128
    %v72 = vadd.s32 %v70, 256
    %v73 = vadd.s32 %v70, 384
    %v74 = vadd.s32 %v62, 24
    %v75 = vstv %s27
    %v76 = vadd.s32 %v70, %v75
    %v77 = vadd.s32 %v71, %v75
    // Predicated region
    $region18: #{mel_aug.1} parent=1 // pred_check
      %p78 = pneg %p29
    $region19: #{mel_aug.1} parent=1 // pred_check_branch
      %80 = sbr.rel (%p78) target = $region21
    $region20: #{mel_aug.1} parent=1 // pred_region
      %s81 = smul.u32 8, 4
      %s82 = smul.u32 %s81, 3
      %s83 = smul.u32 %s82, 4
      %s84 = sshll.u32 %s83, 4
      %85 = dma.done [#allocation4], %s84
      %v86 = vld [vmem:[#allocation2] sm:$0xff]
      %v87 = vld [vmem:[#allocation2 + $0x8] sm:$0xff]
      %v88 = vld [vmem:[#allocation2 + $0x10] sm:$0xff]
      %v89 = vld [vmem:[#allocation2 + $0x18] sm:$0xff]
      %v90 = vld [vmem:[#allocation2 + $0x20] sm:$0xff]
      %v91 = vld [vmem:[#allocation2 + $0x28] sm:$0xff]
      %v92 = vld [vmem:[#allocation2 + $0x30] sm:$0xff]
      %v93 = vld [vmem:[#allocation2 + $0x38] sm:$0xff]
      %v94 = vld [vmem:[#allocation2 + $0x40] sm:$0xff]
      %v95 = vld [vmem:[#allocation2 + $0x48] sm:$0xff]
      %v96 = vld [vmem:[#allocation2 + $0x50] sm:$0xff]
      %v97 = vld [vmem:[#allocation2 + $0x58] sm:$0xff]
      %v98 = vld [vmem:[#allocation2 + $0x60] sm:$0xff]
      %v99 = vld [vmem:[#allocation2 + $0x68] sm:$0xff]
      %v100 = vld [vmem:[#allocation2 + $0x70] sm:$0xff]
      %v101 = vld [vmem:[#allocation2 + $0x78] sm:$0xff]
      %v102 = vld [vmem:[#allocation2 + $0x80] sm:$0xff]
      %v103 = vld [vmem:[#allocation2 + $0x88] sm:$0xff]
      %v104 = vld [vmem:[#allocation2 + $0x90] sm:$0xff]
      %v105 = vld [vmem:[#allocation2 + $0x98] sm:$0xff]
      %v106 = vld [vmem:[#allocation2 + $0xa0] sm:$0xff]
      %v107 = vld [vmem:[#allocation2 + $0xa8] sm:$0xff]
      %v108 = vld [vmem:[#allocation2 + $0xb0] sm:$0xff]
      %v109 = vld [vmem:[#allocation2 + $0xb8] sm:$0xff]
      %v110 = vld [vmem:[#allocation2 + $0xc0] sm:$0xff]
      %v111 = vld [vmem:[#allocation2 + $0xc8] sm:$0xff]
      %v112 = vld [vmem:[#allocation2 + $0xd0] sm:$0xff]
      %v113 = vld [vmem:[#allocation2 + $0xd8] sm:$0xff]
      %v114 = vld [vmem:[#allocation2 + $0xe0] sm:$0xff]
      %v115 = vld [vmem:[#allocation2 + $0xe8] sm:$0xff]
      %v116 = vld [vmem:[#allocation2 + $0xf0] sm:$0xff]
      %v117 = vld [vmem:[#allocation2 + $0xf8] sm:$0xff]
      %v118 = vld [vmem:[#allocation2 + $0x100] sm:$0xff]
      %v119 = vld [vmem:[#allocation2 + $0x108] sm:$0xff]
      %v120 = vld [vmem:[#allocation2 + $0x110] sm:$0xff]
      %v121 = vld [vmem:[#allocation2 + $0x118] sm:$0xff]
      %v122 = vld [vmem:[#allocation2 + $0x120] sm:$0xff]
      %v123 = vld [vmem:[#allocation2 + $0x128] sm:$0xff]
      %v124 = vld [vmem:[#allocation2 + $0x130] sm:$0xff]
      %v125 = vld [vmem:[#allocation2 + $0x138] sm:$0xff]
      %v126 = vld [vmem:[#allocation2 + $0x140] sm:$0xff]
      %v127 = vld [vmem:[#allocation2 + $0x148] sm:$0xff]
      %v128 = vld [vmem:[#allocation2 + $0x150] sm:$0xff]
      %v129 = vld [vmem:[#allocation2 + $0x158] sm:$0xff]
      %v130 = vld [vmem:[#allocation2 + $0x160] sm:$0xff]
      %v131 = vld [vmem:[#allocation2 + $0x168] sm:$0xff]
      %v132 = vld [vmem:[#allocation2 + $0x170] sm:$0xff]
      %v133 = vld [vmem:[#allocation2 + $0x178] sm:$0xff]
      %v134 = vstv %s22
      %vm135 = vcmp.ge.s32.totalorder %v66, %v134
      %vm136 = vcmp.ge.s32.totalorder %v67, %v134
      %vm137 = vcmp.ge.s32.totalorder %v68, %v134
      %v138 = vstv %s23
      %vm139 = vcmp.lt.s32.totalorder %v66, %v138
      %vm140 = vcmp.lt.s32.totalorder %v67, %v138
      %vm141 = vcmp.lt.s32.totalorder %v68, %v138
      %vm142 = vmand %vm135, %vm139
      %vm143 = vmand %vm136, %vm140
      %vm144 = vmand %vm137, %vm141
      %v145 = vstv %s25
      %vm146 = vcmp.ge.s32.totalorder %v70, %v145
      %vm147 = vcmp.ge.s32.totalorder %v71, %v145
      %vm148 = vcmp.ge.s32.totalorder %v72, %v145
      %vm149 = vcmp.ge.s32.totalorder %v73, %v145
      %v150 = vstv %s26
      %vm151 = vcmp.lt.s32.totalorder %v70, %v150
      %vm152 = vcmp.lt.s32.totalorder %v71, %v150
      %vm153 = vcmp.lt.s32.totalorder %v72, %v150
      %vm154 = vcmp.lt.s32.totalorder %v73, %v150
      %vm155 = vmand %vm146, %vm151
      %vm156 = vmand %vm147, %vm152
      %vm157 = vmand %vm148, %vm153
      %vm158 = vmand %vm149, %vm154
      %v159 = vsel %vm142, 1, 0
      %v160 = vsel %vm143, 1, 0
      %v161 = vsel %vm144, 1, 0
      %vm162 = vcmp.eq.s32.totalorder %v159, 1
      %vm163 = vcmp.eq.s32.totalorder %v160, 1
      %vm164 = vcmp.eq.s32.totalorder %v161, 1
      %v165 = vsel %vm155, 1, 0
      %v166 = vsel %vm156, 1, 0
      %v167 = vsel %vm157, 1, 0
      %v168 = vsel %vm158, 1, 0
      %vm169 = vcmp.eq.s32.totalorder %v165, 1
      %vm170 = vcmp.eq.s32.totalorder %v166, 1
      %vm171 = vcmp.eq.s32.totalorder %v167, 1
      %vm172 = vcmp.eq.s32.totalorder %v168, 1
      %vm173 = vmor %vm162, %vm169
      %vm174 = vmor %vm162, %vm170
      %vm175 = vmor %vm162, %vm171
      %vm176 = vmor %vm162, %vm172
      %vm177 = vmor %vm163, %vm169
      %vm178 = vmor %vm163, %vm170
      %vm179 = vmor %vm163, %vm171
      %vm180 = vmor %vm163, %vm172
      %vm181 = vmor %vm164, %vm169
      %vm182 = vmor %vm164, %vm170
      %vm183 = vmor %vm164, %vm171
      %vm184 = vmor %vm164, %vm172
      %v185 = vsel %vm173, 1, 0
      %v186 = vsel %vm174, 1, 0
      %v187 = vsel %vm175, 1, 0
      %v188 = vsel %vm176, 1, 0
      %v189 = vsel %vm177, 1, 0
      %v190 = vsel %vm178, 1, 0
      %v191 = vsel %vm179, 1, 0
      %v192 = vsel %vm180, 1, 0
      %v193 = vsel %vm181, 1, 0
      %v194 = vsel %vm182, 1, 0
      %v195 = vsel %vm183, 1, 0
      %v196 = vsel %vm184, 1, 0
      %vm197 = vcmp.eq.s32.totalorder %v185, 1
      %vm198 = vcmp.eq.s32.totalorder %v186, 1
      %vm199 = vcmp.eq.s32.totalorder %v187, 1
      %vm200 = vcmp.eq.s32.totalorder %v188, 1
      %vm201 = vcmp.eq.s32.totalorder %v189, 1
      %vm202 = vcmp.eq.s32.totalorder %v190, 1
      %vm203 = vcmp.eq.s32.totalorder %v191, 1
      %vm204 = vcmp.eq.s32.totalorder %v192, 1
      %vm205 = vcmp.eq.s32.totalorder %v193, 1
      %vm206 = vcmp.eq.s32.totalorder %v194, 1
      %vm207 = vcmp.eq.s32.totalorder %v195, 1
      %vm208 = vcmp.eq.s32.totalorder %v196, 1
      %v209 = vsel %vm197, 0.0, %v86
      %v210 = vsel %vm198, 0.0, %v87
      %v211 = vsel %vm199, 0.0, %v88
      %v212 = vsel %vm200, 0.0, %v89
      %v213 = vsel %vm201, 0.0, %v90
      %v214 = vsel %vm202, 0.0, %v91
      %v215 = vsel %vm203, 0.0, %v92
      %v216 = vsel %vm204, 0.0, %v93
      %v217 = vsel %vm205, 0.0, %v94
      %v218 = vsel %vm206, 0.0, %v95
      %v219 = vsel %vm207, 0.0, %v96
      %v220 = vsel %vm208, 0.0, %v97
      %v221 = vsel %vm197, 0.0, %v98
      %v222 = vsel %vm198, 0.0, %v99
      %v223 = vsel %vm199, 0.0, %v100
      %v224 = vsel %vm200, 0.0, %v101
      %v225 = vsel %vm201, 0.0, %v102
      %v226 = vsel %vm202, 0.0, %v103
      %v227 = vsel %vm203, 0.0, %v104
      %v228 = vsel %vm204, 0.0, %v105
      %v229 = vsel %vm205, 0.0, %v106
      %v230 = vsel %vm206, 0.0, %v107
      %v231 = vsel %vm207, 0.0, %v108
      %v232 = vsel %vm208, 0.0, %v109
      %v233 = vsel %vm197, 0.0, %v110
      %v234 = vsel %vm198, 0.0, %v111
      %v235 = vsel %vm199, 0.0, %v112
      %v236 = vsel %vm200, 0.0, %v113
      %v237 = vsel %vm201, 0.0, %v114
      %v238 = vsel %vm202, 0.0, %v115
      %v239 = vsel %vm203, 0.0, %v116
      %v240 = vsel %vm204, 0.0, %v117
      %v241 = vsel %vm205, 0.0, %v118
      %v242 = vsel %vm206, 0.0, %v119
      %v243 = vsel %vm207, 0.0, %v120
      %v244 = vsel %vm208, 0.0, %v121
      %v245 = vsel %vm197, 0.0, %v122
      %v246 = vsel %vm198, 0.0, %v123
      %v247 = vsel %vm199, 0.0, %v124
      %v248 = vsel %vm200, 0.0, %v125
      %v249 = vsel %vm201, 0.0, %v126
      %v250 = vsel %vm202, 0.0, %v127
      %v251 = vsel %vm203, 0.0, %v128
      %v252 = vsel %vm204, 0.0, %v129
      %v253 = vsel %vm205, 0.0, %v130
      %v254 = vsel %vm206, 0.0, %v131
      %v255 = vsel %vm207, 0.0, %v132
      %v256 = vsel %vm208, 0.0, %v133
      %257 = vst [vmem:[#allocation2] sm:$0xff] %v209
      %258 = vst [vmem:[#allocation2 + $0x8] sm:$0xff] %v210
      %259 = vst [vmem:[#allocation2 + $0x10] sm:$0xff] %v211
      %260 = vst [vmem:[#allocation2 + $0x18] sm:$0xff] %v212
      %261 = vst [vmem:[#allocation2 + $0x20] sm:$0xff] %v213
      %262 = vst [vmem:[#allocation2 + $0x28] sm:$0xff] %v214
      %263 = vst [vmem:[#allocation2 + $0x30] sm:$0xff] %v215
      %264 = vst [vmem:[#allocation2 + $0x38] sm:$0xff] %v216
      %265 = vst [vmem:[#allocation2 + $0x40] sm:$0xff] %v217
      %266 = vst [vmem:[#allocation2 + $0x48] sm:$0xff] %v218
      %267 = vst [vmem:[#allocation2 + $0x50] sm:$0xff] %v219
      %268 = vst [vmem:[#allocation2 + $0x58] sm:$0xff] %v220
      %269 = vst [vmem:[#allocation2 + $0x60] sm:$0xff] %v221
      %270 = vst [vmem:[#allocation2 + $0x68] sm:$0xff] %v222
      %271 = vst [vmem:[#allocation2 + $0x70] sm:$0xff] %v223
      %272 = vst [vmem:[#allocation2 + $0x78] sm:$0xff] %v224
      %273 = vst [vmem:[#allocation2 + $0x80] sm:$0xff] %v225
      %274 = vst [vmem:[#allocation2 + $0x88] sm:$0xff] %v226
      %275 = vst [vmem:[#allocation2 + $0x90] sm:$0xff] %v227
      %276 = vst [vmem:[#allocation2 + $0x98] sm:$0xff] %v228
      %277 = vst [vmem:[#allocation2 + $0xa0] sm:$0xff] %v229
      %278 = vst [vmem:[#allocation2 + $0xa8] sm:$0xff] %v230
      %279 = vst [vmem:[#allocation2 + $0xb0] sm:$0xff] %v231
      %280 = vst [vmem:[#allocation2 + $0xb8] sm:$0xff] %v232
      %281 = vst [vmem:[#allocation2 + $0xc0] sm:$0xff] %v233
      %282 = vst [vmem:[#allocation2 + $0xc8] sm:$0xff] %v234
      %283 = vst [vmem:[#allocation2 + $0xd0] sm:$0xff] %v235
      %284 = vst [vmem:[#allocation2 + $0xd8] sm:$0xff] %v236
      %285 = vst [vmem:[#allocation2 + $0xe0] sm:$0xff] %v237
      %286 = vst [vmem:[#allocation2 + $0xe8] sm:$0xff] %v238
      %287 = vst [vmem:[#allocation2 + $0xf0] sm:$0xff] %v239
      %288 = vst [vmem:[#allocation2 + $0xf8] sm:$0xff] %v240
      %289 = vst [vmem:[#allocation2 + $0x100] sm:$0xff] %v241
      %290 = vst [vmem:[#allocation2 + $0x108] sm:$0xff] %v242
      %291 = vst [vmem:[#allocation2 + $0x110] sm:$0xff] %v243
      %292 = vst [vmem:[#allocation2 + $0x118] sm:$0xff] %v244
      %293 = vst [vmem:[#allocation2 + $0x120] sm:$0xff] %v245
      %294 = vst [vmem:[#allocation2 + $0x128] sm:$0xff] %v246
      %295 = vst [vmem:[#allocation2 + $0x130] sm:$0xff] %v247
      %296 = vst [vmem:[#allocation2 + $0x138] sm:$0xff] %v248
      %297 = vst [vmem:[#allocation2 + $0x140] sm:$0xff] %v249
      %298 = vst [vmem:[#allocation2 + $0x148] sm:$0xff] %v250
      %299 = vst [vmem:[#allocation2 + $0x150] sm:$0xff] %v251
      %300 = vst [vmem:[#allocation2 + $0x158] sm:$0xff] %v252
      %301 = vst [vmem:[#allocation2 + $0x160] sm:$0xff] %v253
      %302 = vst [vmem:[#allocation2 + $0x168] sm:$0xff] %v254
      %303 = vst [vmem:[#allocation2 + $0x170] sm:$0xff] %v255
      %304 = vst [vmem:[#allocation2 + $0x178] sm:$0xff] %v256
    $region21: #{mel_aug.1} parent=1 // pred_fallthru
      _
    // Predicated region
    $region22: #{mel_aug.1} parent=1 // pred_check
      %p305 = pneg %p30
    $region23: #{mel_aug.1} parent=1 // pred_check_branch
      %307 = sbr.rel (%p305) target = $region25
    $region24: #{mel_aug.1} parent=1 // pred_region
      %s308 = scalar_lea.sflag [#allocation4], 1
      %s309 = smul.u32 8, 4
      %s310 = smul.u32 %s309, 4
      %s311 = smul.u32 %s310, 2
      %s312 = sshll.u32 %s311, 4
      %313 = dma.done %s308, %s312
    $region25: #{mel_aug.1} parent=1 // pred_fallthru
      _
    // Predicated region
    $region26: #{mel_aug.1} parent=1 // pred_check
      %p314 = pneg %p29
    $region27: #{mel_aug.1} parent=1 // pred_check_branch
      %316 = sbr.rel (%p314) target = $region29
    $region28: #{mel_aug.1} parent=1 // pred_region
      %s317 = sshra.s32 %s24, 3
      %s318 = sand.u32 %s24, 7
      %s319 = smul.u32 %s317, 4
      %s320 = smul.u32 %s28, 16
      %s321 = sadd.s32 %s319, %s320
      %s322 = smul.addr %s321, 128
      %s323 = scalar_lea.hbm %s2, %s322
      %s325 = sshll.u32 [#allocation2], 4
      %s326 = int_to_ptr.vmem [resolvable:$true] %s325
      %328 = dma.vmem_to_hbm [thread:$0]  %s326, 6144, %s323, [#allocation4], 1536, 2048, 96
    $region29: #{mel_aug.1} parent=1 // pred_fallthru
      _
    // Predicated region
    $region30: #{mel_aug.1} parent=1 // pred_check
      %p329 = pneg %p30
    $region31: #{mel_aug.1} parent=1 // pred_check_branch
      %331 = sbr.rel (%p329) target = $region33
    $region32: #{mel_aug.1} parent=1 // pred_region
      %v332 = vld [vmem:[#allocation3] sm:$0xff]
      %v333 = vld [vmem:[#allocation3 + $0x8] sm:$0xff]
      %v334 = vld [vmem:[#allocation3 + $0x10] sm:$0xff]
      %v335 = vld [vmem:[#allocation3 + $0x18] sm:$0xff]
      %v336 = vld [vmem:[#allocation3 + $0x20] sm:$0xff]
      %v337 = vld [vmem:[#allocation3 + $0x28] sm:$0xff]
      %v338 = vld [vmem:[#allocation3 + $0x30] sm:$0xff]
      %v339 = vld [vmem:[#allocation3 + $0x38] sm:$0xff]
      %v340 = vld [vmem:[#allocation3 + $0x40] sm:$0xff]
      %v341 = vld [vmem:[#allocation3 + $0x48] sm:$0xff]
      %v342 = vld [vmem:[#allocation3 + $0x50] sm:$0xff]
      %v343 = vld [vmem:[#allocation3 + $0x58] sm:$0xff]
      %v344 = vld [vmem:[#allocation3 + $0x60] sm:$0xff]
      %v345 = vld [vmem:[#allocation3 + $0x68] sm:$0xff]
      %v346 = vld [vmem:[#allocation3 + $0x70] sm:$0xff]
      %v347 = vld [vmem:[#allocation3 + $0x78] sm:$0xff]
      %v348 = vld [vmem:[#allocation3 + $0x80] sm:$0xff]
      %v349 = vld [vmem:[#allocation3 + $0x88] sm:$0xff]
      %v350 = vld [vmem:[#allocation3 + $0x90] sm:$0xff]
      %v351 = vld [vmem:[#allocation3 + $0x98] sm:$0xff]
      %v352 = vld [vmem:[#allocation3 + $0xa0] sm:$0xff]
      %v353 = vld [vmem:[#allocation3 + $0xa8] sm:$0xff]
      %v354 = vld [vmem:[#allocation3 + $0xb0] sm:$0xff]
      %v355 = vld [vmem:[#allocation3 + $0xb8] sm:$0xff]
      %v356 = vld [vmem:[#allocation3 + $0xc0] sm:$0xff]
      %v357 = vld [vmem:[#allocation3 + $0xc8] sm:$0xff]
      %v358 = vld [vmem:[#allocation3 + $0xd0] sm:$0xff]
      %v359 = vld [vmem:[#allocation3 + $0xd8] sm:$0xff]
      %v360 = vld [vmem:[#allocation3 + $0xe0] sm:$0xff]
      %v361 = vld [vmem:[#allocation3 + $0xe8] sm:$0xff]
      %v362 = vld [vmem:[#allocation3 + $0xf0] sm:$0xff]
      %v363 = vld [vmem:[#allocation3 + $0xf8] sm:$0xff]
      %v364 = vstv %s22
      %vm365 = vcmp.ge.s32.totalorder %v62, %v364
      %vm366 = vcmp.ge.s32.totalorder %v63, %v364
      %vm367 = vcmp.ge.s32.totalorder %v64, %v364
      %vm368 = vcmp.ge.s32.totalorder %v74, %v364
      %v369 = vstv %s23
      %vm370 = vcmp.lt.s32.totalorder %v62, %v369
      %vm371 = vcmp.lt.s32.totalorder %v63, %v369
      %vm372 = vcmp.lt.s32.totalorder %v64, %v369
      %vm373 = vcmp.lt.s32.totalorder %v74, %v369
      %vm374 = vmand %vm365, %vm370
      %vm375 = vmand %vm366, %vm371
      %vm376 = vmand %vm367, %vm372
      %vm377 = vmand %vm368, %vm373
      %v378 = vstv %s25
      %vm379 = vcmp.ge.s32.totalorder %v76, %v378
      %vm380 = vcmp.ge.s32.totalorder %v77, %v378
      %v381 = vstv %s26
      %vm382 = vcmp.lt.s32.totalorder %v76, %v381
      %vm383 = vcmp.lt.s32.totalorder %v77, %v381
      %vm384 = vmand %vm379, %vm382
      %vm385 = vmand %vm380, %vm383
      %v386 = vsel %vm374, 1, 0
      %v387 = vsel %vm375, 1, 0
      %v388 = vsel %vm376, 1, 0
      %v389 = vsel %vm377, 1, 0
      %vm390 = vcmp.eq.s32.totalorder %v386, 1
      %vm391 = vcmp.eq.s32.totalorder %v387, 1
      %vm392 = vcmp.eq.s32.totalorder %v388, 1
      %vm393 = vcmp.eq.s32.totalorder %v389, 1
      %v394 = vsel %vm384, 1, 0
      %v395 = vsel %vm385, 1, 0
      %vm396 = vcmp.eq.s32.totalorder %v394, 1
      %vm397 = vcmp.eq.s32.totalorder %v395, 1
      %vm398 = vmor %vm390, %vm396
      %vm399 = vmor %vm390, %vm397
      %vm400 = vmor %vm391, %vm396
      %vm401 = vmor %vm391, %vm397
      %vm402 = vmor %vm392, %vm396
      %vm403 = vmor %vm392, %vm397
      %vm404 = vmor %vm393, %vm396
      %vm405 = vmor %vm393, %vm397
      %v406 = vsel %vm398, 1, 0
      %v407 = vsel %vm399, 1, 0
      %v408 = vsel %vm400, 1, 0
      %v409 = vsel %vm401, 1, 0
      %v410 = vsel %vm402, 1, 0
      %v411 = vsel %vm403, 1, 0
      %v412 = vsel %vm404, 1, 0
      %v413 = vsel %vm405, 1, 0
      %vm414 = vcmp.eq.s32.totalorder %v406, 1
      %vm415 = vcmp.eq.s32.totalorder %v407, 1
      %vm416 = vcmp.eq.s32.totalorder %v408, 1
      %vm417 = vcmp.eq.s32.totalorder %v409, 1
      %vm418 = vcmp.eq.s32.totalorder %v410, 1
      %vm419 = vcmp.eq.s32.totalorder %v411, 1
      %vm420 = vcmp.eq.s32.totalorder %v412, 1
      %vm421 = vcmp.eq.s32.totalorder %v413, 1
      %v422 = vsel %vm414, 0.0, %v332
      %v423 = vsel %vm415, 0.0, %v333
      %v424 = vsel %vm416, 0.0, %v334
      %v425 = vsel %vm417, 0.0, %v335
      %v426 = vsel %vm418, 0.0, %v336
      %v427 = vsel %vm419, 0.0, %v337
      %v428 = vsel %vm420, 0.0, %v338
      %v429 = vsel %vm421, 0.0, %v339
      %v430 = vsel %vm414, 0.0, %v340
      %v431 = vsel %vm415, 0.0, %v341
      %v432 = vsel %vm416, 0.0, %v342
      %v433 = vsel %vm417, 0.0, %v343
      %v434 = vsel %vm418, 0.0, %v344
      %v435 = vsel %vm419, 0.0, %v345
      %v436 = vsel %vm420, 0.0, %v346
      %v437 = vsel %vm421, 0.0, %v347
      %v438 = vsel %vm414, 0.0, %v348
      %v439 = vsel %vm415, 0.0, %v349
      %v440 = vsel %vm416, 0.0, %v350
      %v441 = vsel %vm417, 0.0, %v351
      %v442 = vsel %vm418, 0.0, %v352
      %v443 = vsel %vm419, 0.0, %v353
      %v444 = vsel %vm420, 0.0, %v354
      %v445 = vsel %vm421, 0.0, %v355
      %v446 = vsel %vm414, 0.0, %v356
      %v447 = vsel %vm415, 0.0, %v357
      %v448 = vsel %vm416, 0.0, %v358
      %v449 = vsel %vm417, 0.0, %v359
      %v450 = vsel %vm418, 0.0, %v360
      %v451 = vsel %vm419, 0.0, %v361
      %v452 = vsel %vm420, 0.0, %v362
      %v453 = vsel %vm421, 0.0, %v363
      %454 = vst [vmem:[#allocation3] sm:$0xff] %v422
      %455 = vst [vmem:[#allocation3 + $0x8] sm:$0xff] %v423
      %456 = vst [vmem:[#allocation3 + $0x10] sm:$0xff] %v424
      %457 = vst [vmem:[#allocation3 + $0x18] sm:$0xff] %v425
      %458 = vst [vmem:[#allocation3 + $0x20] sm:$0xff] %v426
      %459 = vst [vmem:[#allocation3 + $0x28] sm:$0xff] %v427
      %460 = vst [vmem:[#allocation3 + $0x30] sm:$0xff] %v428
      %461 = vst [vmem:[#allocation3 + $0x38] sm:$0xff] %v429
      %462 = vst [vmem:[#allocation3 + $0x40] sm:$0xff] %v430
      %463 = vst [vmem:[#allocation3 + $0x48] sm:$0xff] %v431
      %464 = vst [vmem:[#allocation3 + $0x50] sm:$0xff] %v432
      %465 = vst [vmem:[#allocation3 + $0x58] sm:$0xff] %v433
      %466 = vst [vmem:[#allocation3 + $0x60] sm:$0xff] %v434
      %467 = vst [vmem:[#allocation3 + $0x68] sm:$0xff] %v435
      %468 = vst [vmem:[#allocation3 + $0x70] sm:$0xff] %v436
      %469 = vst [vmem:[#allocation3 + $0x78] sm:$0xff] %v437
      %470 = vst [vmem:[#allocation3 + $0x80] sm:$0xff] %v438
      %471 = vst [vmem:[#allocation3 + $0x88] sm:$0xff] %v439
      %472 = vst [vmem:[#allocation3 + $0x90] sm:$0xff] %v440
      %473 = vst [vmem:[#allocation3 + $0x98] sm:$0xff] %v441
      %474 = vst [vmem:[#allocation3 + $0xa0] sm:$0xff] %v442
      %475 = vst [vmem:[#allocation3 + $0xa8] sm:$0xff] %v443
      %476 = vst [vmem:[#allocation3 + $0xb0] sm:$0xff] %v444
      %477 = vst [vmem:[#allocation3 + $0xb8] sm:$0xff] %v445
      %478 = vst [vmem:[#allocation3 + $0xc0] sm:$0xff] %v446
      %479 = vst [vmem:[#allocation3 + $0xc8] sm:$0xff] %v447
      %480 = vst [vmem:[#allocation3 + $0xd0] sm:$0xff] %v448
      %481 = vst [vmem:[#allocation3 + $0xd8] sm:$0xff] %v449
      %482 = vst [vmem:[#allocation3 + $0xe0] sm:$0xff] %v450
      %483 = vst [vmem:[#allocation3 + $0xe8] sm:$0xff] %v451
      %484 = vst [vmem:[#allocation3 + $0xf0] sm:$0xff] %v452
      %485 = vst [vmem:[#allocation3 + $0xf8] sm:$0xff] %v453
    $region33: #{mel_aug.1} parent=1 // pred_fallthru
      _
    // Predicated region
    $region34: #{mel_aug.1} parent=1 // pred_check
      %p486 = pneg %p29
    $region35: #{mel_aug.1} parent=1 // pred_check_branch
      %488 = sbr.rel (%p486) target = $region37
    $region36: #{mel_aug.1} parent=1 // pred_region
      %s489 = smul.u32 8, 4
      %s490 = smul.u32 %s489, 3
      %s491 = smul.u32 %s490, 4
      %s492 = sshll.u32 %s491, 4
      %493 = dma.done [#allocation4], %s492
    $region37: #{mel_aug.1} parent=1 // pred_fallthru
      _
    // Predicated region
    $region38: #{mel_aug.1} parent=1 // pred_check
      %p494 = pneg %p30
    $region39: #{mel_aug.1} parent=1 // pred_check_branch
      %496 = sbr.rel (%p494) target = $region41
    $region40: #{mel_aug.1} parent=1 // pred_region
      %s497 = sshra.s32 %s27, 7
      %s498 = sand.u32 %s27, 127
      %s499 = smul.u32 %s28, 16
      %s500 = sadd.s32 %s497, %s499
      %s501 = smul.addr %s500, 128
      %s502 = scalar_lea.hbm %s2, %s501
      %s503 = scalar_lea.sflag [#allocation4], 1
      %s505 = sshll.u32 [#allocation3], 4
      %s506 = int_to_ptr.vmem [resolvable:$true] %s505
      %508 = dma.vmem_to_hbm [thread:$0]  %s506, 4096, %s502, %s503, 256, 512, 16
      %s509 = smul.u32 8, 4
      %s510 = smul.u32 %s509, 4
      %s511 = smul.u32 %s510, 2
      %s512 = sshll.u32 %s511, 4
      %513 = dma.done %s503, %s512
    $region41: #{mel_aug.1} parent=1 // pred_fallthru
      _
    %514 = vsyncpa [#allocation6], 1
  %515 = vsyncmov [#allocation4]
  %s516 = vpop.sfrf %515
  %p517 = scmp.eq.s32.totalorder %s516, 0
  %p518 = pneg %p517
  %520 = shalt.err (%p518)
  %s521 = scalar_lea.sflag [#allocation4], 1
  %522 = vsyncmov %s521
  %s523 = vpop.sfrf %522
  %p524 = scmp.eq.s32.totalorder %s523, 0
  %p525 = pneg %p524
  %527 = shalt.err (%p525)

</llo_original>
